<compile_context>
chip_gen: v7x
topology: tpu7x:2x2x1
jax: 0.10.0
libtpu: 0.0.40
codegen_flags: <defaults>
</compile_context>

<pallas_src>
import jax
import jax.numpy as jnp
from jax.experimental import pallas as pl
from jax.experimental.pallas import tpu as pltpu
import numpy as np

LANE = 128  # TPU lane width; hidden feature dims are padded to this (VMEM-only).


# ----------------------------- Pallas kernel --------------------------------
def nnmodel_kernel(x_ref, w0_ref, b0_ref, w1_ref, b1_ref, w2_ref, b2_ref, o_ref):
    cdt = w1_ref.dtype  # compute dtype of the matmul operands (bf16 by default)
    # NormalizeLayer already folded into (w0, b0) at parameter-build time.
    # Linear(input_size -> H0_pad) + ReLU  (bf16 operands, f32 accumulation)
    h = jnp.dot(x_ref[...], w0_ref[...], preferred_element_type=jnp.float32) + b0_ref[...]
    h = jnp.maximum(h, 0.0).astype(cdt)
    # Linear(H0_pad -> H1_pad) + ReLU
    h = jnp.dot(h, w1_ref[...], preferred_element_type=jnp.float32) + b1_ref[...]
    h = jnp.maximum(h, 0.0).astype(cdt)
    # Final Linear(H1_pad -> output_size), no final activation. Output keeps
    # the REAL output width (no lane padding) so HBM writeback is minimal.
    o_ref[...] = (jnp.dot(h, w2_ref[...], preferred_element_type=jnp.float32)
                  + b2_ref[...]).astype(o_ref.dtype)


def _round_up(n, m):
    return ((n + m - 1) // m) * m


def nnmodel_forward(x, params, *, tile_b=4096, min_grid_steps=8):
    """Run the fused MLP. `params` are the folded+padded kernel parameters."""
    w0, b0, w1, b1, w2, b2 = params
    B, D = x.shape
    H0 = w0.shape[1]
    H1 = w1.shape[1]
    O = w2.shape[1]  # real output width (no padding)

    # Cast activations to the matmul compute dtype (bf16); biases stay f32.
    x = x.astype(w0.dtype)

    # Batch tile: large (amortizes per-grid-step overhead), 16-sublane aligned
    # (bf16 packing), no wrapper-side padding of x.  When the batch is large,
    # cap the tile so the grid keeps >= min_grid_steps steps so v7x's two
    # TensorCores both get work via the "parallel" axis.
    tb = _round_up(min(tile_b, B), 16)
    if B > min_grid_steps * 256:
        tb = min(tb, _round_up(pl.cdiv(B, min_grid_steps), 16))
    grid = (pl.cdiv(B, tb),)  # ragged last block handled by Pallas masking

    # Advisory cost estimate so XLA schedules this small custom call well.
    param_bytes = sum(int(p.size) * p.dtype.itemsize for p in params)
    cost = pl.CostEstimate(
        flops=2 * B * (D * H0 + H0 * H1 + H1 * O),
        transcendentals=0,
        bytes_accessed=int(B * D * x.dtype.itemsize + B * O * 4 + param_bytes),
    )

    const = lambda i: (0, 0)
    out = pl.pallas_call(
        nnmodel_kernel,
        out_shape=jax.ShapeDtypeStruct((B, O), jnp.float32),
        grid=grid,
        in_specs=[
            pl.BlockSpec((tb, D), lambda i: (i, 0)),   # x tile, pipelined
            pl.BlockSpec((D, H0), const),              # weights: VMEM-resident
            pl.BlockSpec((1, H0), const),              # (constant index_maps ->
            pl.BlockSpec((H0, H1), const),             #  never re-DMA'd)
            pl.BlockSpec((1, H1), const),
            pl.BlockSpec((H1, O), const),
            pl.BlockSpec((1, O), const),
        ],
        out_specs=pl.BlockSpec((tb, O), lambda i: (i, 0)),
        compiler_params=pltpu.CompilerParams(
            dimension_semantics=("parallel",),
            vmem_limit_bytes=48 * 1024 * 1024,  # headroom for big tb on v7x's 64 MiB VMEM
        ),
        cost_estimate=cost,
    )(x, w0, b0, w1, b1, w2, b2)
    return out


# ---------------------------- parameter setup --------------------------------
def xavier_uniform(key, fan_in, fan_out):
    # matches nn.init.xavier_uniform_ (gain=1); stored as (in, out) = W^T
    limit = float(np.sqrt(6.0 / (fan_in + fan_out)))
    return jax.random.uniform(key, (fan_in, fan_out), jnp.float32, -limit, limit)


def linear_bias(key, fan_in, fan_out):
    # PyTorch default Linear bias init: U(-1/sqrt(fan_in), 1/sqrt(fan_in))
    bound = float(1.0 / np.sqrt(fan_in))
    return jax.random.uniform(key, (fan_out,), jnp.float32, -bound, bound)


def build_normalize_ab(normalize_cfg, input_size):
    # Reproduces NormalizeLayer's per-feature affine coefficients a, b.
    a = np.zeros((input_size,), dtype=np.float32)
    b = np.zeros((input_size,), dtype=np.float32)
    prev = 0
    for x_min, x_max, u, l, length in zip(normalize_cfg['x_min'],
                                          normalize_cfg['x_max'],
                                          normalize_cfg['u'],
                                          normalize_cfg['l'],
                                          normalize_cfg['lengths']):
        scale = (u - l) / (x_max - x_min)
        a[prev:prev + length] = scale
        b[prev:prev + length] = l - x_min * scale
        prev += length
    return jnp.asarray(a), jnp.asarray(b)  # (D,), (D,)


def _pad_cols(w, n):
    return jnp.pad(w, ((0, 0), (0, n - w.shape[1])))


def _pad_rows(w, n):
    return jnp.pad(w, ((0, n - w.shape[0]), (0, 0)))


def build_kernel_params(a, b, w0, b0, w1, b1, w2, b2, lane=LANE,
                        compute_dtype=jnp.bfloat16):
    """Fold the normalize affine into layer 0, zero-pad HIDDEN widths only,
    and cast the matmul operands (weights) to the compute dtype (bf16)."""
    # Fold (in f32): (a*x + b) @ w0 + b0 == x @ (diag(a) @ w0) + (b @ w0 + b0)
    w0f = a[:, None] * w0            # (D, H0)
    b0f = b @ w0 + b0                # (H0,)
    # Zero-pad hidden widths to the lane width (exact: padded cols stay 0
    # through bias+ReLU and contribute 0 to later dots). Output width is NOT
    # padded -- it is stored at its real width.
    w0p = _pad_cols(w0f, lane).astype(compute_dtype)                 # (D, 128)
    b0p = jnp.pad(b0f, (0, lane - b0f.shape[0]))[None, :]            # (1, 128) f32
    w1p = _pad_cols(_pad_rows(w1, lane), lane).astype(compute_dtype)  # (128, 128)
    b1p = jnp.pad(b1, (0, lane - b1.shape[0]))[None, :]              # (1, 128) f32
    w2p = _pad_rows(w2, lane).astype(compute_dtype)                  # (128, O)
    b2p = b2[None, :]                                                # (1, O) f32
    return (w0p, b0p, w1p, b1p, w2p, b2p)


if __name__ == "__main__":
    # Small shapes consistent with the module's forward. Batch deliberately
    # not a multiple of the tile so the ragged last grid block is exercised.
    BATCH = 200
    INPUT_SIZE = 8
    HIDDEN = [32, 32]
    OUTPUT_SIZE = 4

    normalize_cfg = {
        'x_min': [-1.0, 0.0],
        'x_max': [1.0, 10.0],
        'u': [1.0, 1.0],
        'l': [-1.0, 0.0],
        'lengths': [4, 4],
    }

    key = jax.random.PRNGKey(0)
    k_x, k_w0, k_b0, k_w1, k_b1, k_w2, k_b2 = jax.random.split(key, 7)

    x = jax.random.normal(k_x, (BATCH, INPUT_SIZE), jnp.float32)

    a_vec, b_vec = build_normalize_ab(normalize_cfg, INPUT_SIZE)

    w0 = xavier_uniform(k_w0, INPUT_SIZE, HIDDEN[0])
    b0 = linear_bias(k_b0, INPUT_SIZE, HIDDEN[0])
    w1 = xavier_uniform(k_w1, HIDDEN[0], HIDDEN[1])
    b1 = linear_bias(k_b1, HIDDEN[0], HIDDEN[1])
    w2 = xavier_uniform(k_w2, HIDDEN[1], OUTPUT_SIZE)
    b2 = linear_bias(k_b2, HIDDEN[1], OUTPUT_SIZE)

    params = build_kernel_params(a_vec, b_vec, w0, b0, w1, b1, w2, b2)

    # Small demo tile so the grid takes several pipelined (and on v7x,
    # core-parallel) steps and includes a ragged tail block; real runs use
    # the large default tile_b.
    out = nnmodel_forward(x, params, tile_b=64)
    out = jax.block_until_ready(out)
    assert out.shape == (BATCH, OUTPUT_SIZE)

    # Pure-JAX f32 reference of the ORIGINAL (unfolded, unpadded) forward pass.
    # Tolerance is loosened because the kernel runs the matmuls with bf16
    # operands (f32 accumulation), as recommended by the performance review.
    h = a_vec[None, :] * x + b_vec[None, :]
    h = jnp.maximum(h @ w0 + b0[None, :], 0.0)
    h = jnp.maximum(h @ w1 + b1[None, :], 0.0)
    ref = h @ w2 + b2[None, :]
    np.testing.assert_allclose(np.asarray(out), np.asarray(ref),
                               rtol=3e-2, atol=3e-2)

    print("KERNEL_OK")
</pallas_src>

<mosaic_0001>
module attributes {stable_mosaic.version = 11 : i64} {
  func.func @nnmodel_kernel(%arg0: i32, %arg1: memref<64x8xbf16, #tpu.memory_space<vmem>>, %arg2: memref<8x128xbf16, #tpu.memory_space<vmem>>, %arg3: memref<1x128xf32, #tpu.memory_space<vmem>>, %arg4: memref<128x128xbf16, #tpu.memory_space<vmem>>, %arg5: memref<1x128xf32, #tpu.memory_space<vmem>>, %arg6: memref<128x4xbf16, #tpu.memory_space<vmem>>, %arg7: memref<1x4xf32, #tpu.memory_space<vmem>>, %arg8: memref<64x4xf32, #tpu.memory_space<vmem>>) attributes {dimension_semantics = [#tpu.dimension_semantics<parallel>], iteration_bounds = array<i64: 4>, scalar_prefetch = 0 : i64, scratch_operands = 0 : i64, tpu.core_type = #tpu.core_type<tc>, window_params = [{transform_indices = @transform_0, window_bounds = array<i64: 64, 8>}, {pipeline_mode = #tpu.pipeline_mode<synchronous>, transform_indices = @transform_1, window_bounds = array<i64: 8, 128>}, {pipeline_mode = #tpu.pipeline_mode<synchronous>, transform_indices = @transform_2, window_bounds = array<i64: 1, 128>}, {pipeline_mode = #tpu.pipeline_mode<synchronous>, transform_indices = @transform_3, window_bounds = array<i64: 128, 128>}, {pipeline_mode = #tpu.pipeline_mode<synchronous>, transform_indices = @transform_4, window_bounds = array<i64: 1, 128>}, {pipeline_mode = #tpu.pipeline_mode<synchronous>, transform_indices = @transform_5, window_bounds = array<i64: 128, 4>}, {pipeline_mode = #tpu.pipeline_mode<synchronous>, transform_indices = @transform_6, window_bounds = array<i64: 1, 4>}, {transform_indices = @transform_7, window_bounds = array<i64: 64, 4>}]} {
    %c0 = arith.constant 0 : index
    %c0_0 = arith.constant 0 : index
    %0 = vector.load %arg1[%c0, %c0_0] : memref<64x8xbf16, #tpu.memory_space<vmem>>, vector<64x8xbf16>
    %c0_1 = arith.constant 0 : index
    %c0_2 = arith.constant 0 : index
    %1 = vector.load %arg2[%c0_1, %c0_2] : memref<8x128xbf16, #tpu.memory_space<vmem>>, vector<8x128xbf16>
    %cst = arith.constant dense<0.000000e+00> : vector<64x128xf32>
    %2 = tpu.matmul %0, %1, %cst {dimension_numbers = #tpu.dot_dimension_numbers<[1], [0], [0], [1], [0, 0, 1, 1], [], []>} : vector<64x8xbf16>, vector<8x128xbf16>, vector<64x128xf32> -> vector<64x128xf32>
    %c0_3 = arith.constant 0 : index
    %c0_4 = arith.constant 0 : index
    %3 = vector.load %arg3[%c0_3, %c0_4] : memref<1x128xf32, #tpu.memory_space<vmem>>, vector<1x128xf32>
    %4 = vector.broadcast %3 : vector<1x128xf32> to vector<64x128xf32>
    %5 = arith.addf %2, %4 : vector<64x128xf32>
    %cst_5 = arith.constant 0.000000e+00 : f32
    %6 = vector.broadcast %cst_5 : f32 to vector<64x128xf32>
    %7 = arith.maximumf %5, %6 : vector<64x128xf32>
    %8 = arith.truncf %7 : vector<64x128xf32> to vector<64x128xbf16>
    %c0_6 = arith.constant 0 : index
    %c0_7 = arith.constant 0 : index
    %9 = vector.load %arg4[%c0_6, %c0_7] : memref<128x128xbf16, #tpu.memory_space<vmem>>, vector<128x128xbf16>
    %cst_8 = arith.constant dense<0.000000e+00> : vector<64x128xf32>
    %10 = tpu.matmul %8, %9, %cst_8 {dimension_numbers = #tpu.dot_dimension_numbers<[1], [0], [0], [1], [0, 0, 1, 1], [], []>} : vector<64x128xbf16>, vector<128x128xbf16>, vector<64x128xf32> -> vector<64x128xf32>
    %c0_9 = arith.constant 0 : index
    %c0_10 = arith.constant 0 : index
    %11 = vector.load %arg5[%c0_9, %c0_10] : memref<1x128xf32, #tpu.memory_space<vmem>>, vector<1x128xf32>
    %12 = vector.broadcast %11 : vector<1x128xf32> to vector<64x128xf32>
    %13 = arith.addf %10, %12 : vector<64x128xf32>
    %cst_11 = arith.constant 0.000000e+00 : f32
    %14 = vector.broadcast %cst_11 : f32 to vector<64x128xf32>
    %15 = arith.maximumf %13, %14 : vector<64x128xf32>
    %16 = arith.truncf %15 : vector<64x128xf32> to vector<64x128xbf16>
    %c0_12 = arith.constant 0 : index
    %c0_13 = arith.constant 0 : index
    %17 = vector.load %arg6[%c0_12, %c0_13] : memref<128x4xbf16, #tpu.memory_space<vmem>>, vector<128x4xbf16>
    %cst_14 = arith.constant dense<0.000000e+00> : vector<64x4xf32>
    %18 = tpu.matmul %16, %17, %cst_14 {dimension_numbers = #tpu.dot_dimension_numbers<[1], [0], [0], [1], [0, 0, 1, 1], [], []>} : vector<64x128xbf16>, vector<128x4xbf16>, vector<64x4xf32> -> vector<64x4xf32>
    %c0_15 = arith.constant 0 : index
    %c0_16 = arith.constant 0 : index
    %19 = vector.load %arg7[%c0_15, %c0_16] : memref<1x4xf32, #tpu.memory_space<vmem>>, vector<1x4xf32>
    %20 = vector.broadcast %19 : vector<1x4xf32> to vector<64x4xf32>
    %21 = arith.addf %18, %20 : vector<64x4xf32>
    %c0_17 = arith.constant 0 : index
    %c0_18 = arith.constant 0 : index
    %22 = vector.load %arg8[%c0_17, %c0_18] : memref<64x4xf32, #tpu.memory_space<vmem>>, vector<64x4xf32>
    tpu.vector_store %arg8[%c0_17, %c0_18], %21 {strides = array<i32>} : memref<64x4xf32, #tpu.memory_space<vmem>>, vector<64x4xf32>,
    return
  }
  func.func @transform_0(%arg0: i32) -> (i32, i32) {
    %c0_i32 = arith.constant 0 : i32
    %c0_i32_0 = arith.constant 0 : i32
    return %arg0, %c0_i32 : i32, i32
  }
  func.func @transform_1(%arg0: i32) -> (i32, i32) {
    %c0_i32 = arith.constant 0 : i32
    %c0_i32_0 = arith.constant 0 : i32
    %c0_i32_1 = arith.constant 0 : i32
    return %c0_i32, %c0_i32_0 : i32, i32
  }
  func.func @transform_2(%arg0: i32) -> (i32, i32) {
    %c0_i32 = arith.constant 0 : i32
    %c0_i32_0 = arith.constant 0 : i32
    %c0_i32_1 = arith.constant 0 : i32
    return %c0_i32, %c0_i32_0 : i32, i32
  }
  func.func @transform_3(%arg0: i32) -> (i32, i32) {
    %c0_i32 = arith.constant 0 : i32
    %c0_i32_0 = arith.constant 0 : i32
    %c0_i32_1 = arith.constant 0 : i32
    return %c0_i32, %c0_i32_0 : i32, i32
  }
  func.func @transform_4(%arg0: i32) -> (i32, i32) {
    %c0_i32 = arith.constant 0 : i32
    %c0_i32_0 = arith.constant 0 : i32
    %c0_i32_1 = arith.constant 0 : i32
    return %c0_i32, %c0_i32_0 : i32, i32
  }
  func.func @transform_5(%arg0: i32) -> (i32, i32) {
    %c0_i32 = arith.constant 0 : i32
    %c0_i32_0 = arith.constant 0 : i32
    %c0_i32_1 = arith.constant 0 : i32
    return %c0_i32, %c0_i32_0 : i32, i32
  }
  func.func @transform_6(%arg0: i32) -> (i32, i32) {
    %c0_i32 = arith.constant 0 : i32
    %c0_i32_0 = arith.constant 0 : i32
    %c0_i32_1 = arith.constant 0 : i32
    return %c0_i32, %c0_i32_0 : i32, i32
  }
  func.func @transform_7(%arg0: i32) -> (i32, i32) {
    %c0_i32 = arith.constant 0 : i32
    %c0_i32_0 = arith.constant 0 : i32
    return %arg0, %c0_i32 : i32, i32
  }
}

</mosaic_0001>

<llo_original>
// kernel: tpu_custom_call.1
$region0: #{tpu_custom_call.1}
  #allocation0 [shape = 'u32[]', space=smem, size = 0x4, offset = 0x4, fixed_abs, tag = 'smem constant byte address 0x4 - core index']
  #allocation1 [shape = 'u32[144,128]{1,0:T(1,128)}', space=vmem, size = 0x12000, scoped, tag = 'internal scratch']
  %s0 = inlined_call_operand.vmem [shape: bf16[200,8], index: 0, kind: input, shape index: {}]
  %s1 = inlined_call_operand.vmem [shape: bf16[8,128], index: 1, kind: input, shape index: {}]
  %s2 = inlined_call_operand.vmem [shape: f32[1,128], index: 2, kind: input, shape index: {}]
  %s3 = inlined_call_operand.vmem [shape: bf16[128,128], index: 3, kind: input, shape index: {}]
  %s4 = inlined_call_operand.vmem [shape: f32[1,128], index: 4, kind: input, shape index: {}]
  %s5 = inlined_call_operand.vmem [shape: bf16[128,4], index: 5, kind: input, shape index: {}]
  %s6 = inlined_call_operand.vmem [shape: f32[1,4], index: 6, kind: input, shape index: {}]
  %s7 = inlined_call_operand.vmem [shape: f32[200,4], index: 7, kind: output, shape index: {}]
  %s8 = sld [smem:[#allocation0]]
  $region109: #{tpu_custom_call.1} parent=0
    _
  %s10 = ssub.s32 1, %s8
  %s11 = scalar_select 0, %s10, %s8
  $region1: #{tpu_custom_call.1} parent=0
    #allocation2 [shape = 'u8[65536]{0}', space=vmem, size = 0x10000, scoped, tag = 'output window, operand 0']
    loop: start=0, step=1, limit=6
    $region2: #{tpu_custom_call.1} parent=1 // loop_pre_header
      _
    $region3: #{tpu_custom_call.1} parent=1 // loop_header
      %s13 = sphi 0, %s17
      %p14 = scmp.ge.s32.totalorder %s13, 6
      %s23 = sphi 0, %s25
      %s26 = sphi 0, %s23
      %s27 = sphi 0, %s26
      %s43 = sphi 0, %s27
      %s47 = sphi 0, %s47
      %s49 = sphi 0, %s47
      %s50 = sphi 0, %s49
      %s64 = sphi 0, %s50
      %s68 = sphi 0, %s68
      %s70 = sphi 0, %s68
      %s71 = sphi 0, %s70
      %s85 = sphi 0, %s71
      %s89 = sphi 0, %s89
      %s91 = sphi 0, %s89
      %s92 = sphi 0, %s91
      %s106 = sphi 0, %s92
      %s110 = sphi 0, %s110
      %s112 = sphi 0, %s110
      %s113 = sphi 0, %s112
      %s127 = sphi 0, %s113
      %s131 = sphi 0, %s131
      %s133 = sphi 0, %s131
      %s134 = sphi 0, %s133
      %s148 = sphi 0, %s134
      %s152 = sphi 0, %s152
      %s154 = sphi 0, %s152
      %s155 = sphi 0, %s154
      %s169 = sphi 0, %s155
      %s175 = sphi 0, %s177
      %s178 = sphi 0, %s175
      %s179 = sphi 0, %s178
      %s195 = sphi 0, %s179
    $region4: #{tpu_custom_call.1} parent=1 // loop_header_branch
      %16 = sbr.rel (%p14) target = $region8
    $region5: #{tpu_custom_call.1} parent=1 // loop_body
      %s18 = ssub.s32 %s13, 1
      %s19 = ssub.s32 %s13, 2
      %s20 = sadd.s32 %s13, 1
      %s21 = ssub.s32 %s13, %s20
      %p22 = scmp.eq.s32.totalorder %s21, 0
      %s24 = sadd.s32 %s23, 1
      %s25 = scalar_select %p22, %s23, %s24
      %p28 = pneg %p22
      %p29 = scmp.eq.s32.totalorder %s13, 3
      %p30 = por %p28, %p29
      %p31 = scmp.ne.s32.totalorder %s23, %s26
      %p32 = scmp.eq.s32.totalorder %s13, 0
      %p33 = por %p31, %p32
      %p34 = scmp.ne.s32.totalorder %s23, %s26
      %p35 = scmp.eq.s32.totalorder %s18, 3
      %p36 = por %p34, %p35
      %p37 = scmp.ne.s32.totalorder %s26, %s27
      %p38 = scmp.eq.s32.totalorder %s18, 0
      %p39 = por %p37, %p38
      %p40 = scmp.ne.s32.totalorder %s26, %s27
      %p41 = scmp.eq.s32.totalorder %s19, 3
      %p42 = por %p40, %p41
      %p44 = scmp.ne.s32.totalorder %s27, %s43
      %p45 = scmp.eq.s32.totalorder %s19, 0
      %p46 = por %p44, %p45
      %s48 = sadd.s32 %s47, 1
      %p51 = scmp.eq.s32.totalorder %s13, 3
      %p52 = scmp.ne.s32.totalorder %s47, %s49
      %p53 = scmp.eq.s32.totalorder %s13, 0
      %p54 = por %p52, %p53
      %p55 = scmp.ne.s32.totalorder %s47, %s49
      %p56 = scmp.eq.s32.totalorder %s18, 3
      %p57 = por %p55, %p56
      %p58 = scmp.ne.s32.totalorder %s49, %s50
      %p59 = scmp.eq.s32.totalorder %s18, 0
      %p60 = por %p58, %p59
      %p61 = scmp.ne.s32.totalorder %s49, %s50
      %p62 = scmp.eq.s32.totalorder %s19, 3
      %p63 = por %p61, %p62
      %p65 = scmp.ne.s32.totalorder %s50, %s64
      %p66 = scmp.eq.s32.totalorder %s19, 0
      %p67 = por %p65, %p66
      %s69 = sadd.s32 %s68, 1
      %p72 = scmp.eq.s32.totalorder %s13, 3
      %p73 = scmp.ne.s32.totalorder %s68, %s70
      %p74 = scmp.eq.s32.totalorder %s13, 0
      %p75 = por %p73, %p74
      %p76 = scmp.ne.s32.totalorder %s68, %s70
      %p77 = scmp.eq.s32.totalorder %s18, 3
      %p78 = por %p76, %p77
      %p79 = scmp.ne.s32.totalorder %s70, %s71
      %p80 = scmp.eq.s32.totalorder %s18, 0
      %p81 = por %p79, %p80
      %p82 = scmp.ne.s32.totalorder %s70, %s71
      %p83 = scmp.eq.s32.totalorder %s19, 3
      %p84 = por %p82, %p83
      %p86 = scmp.ne.s32.totalorder %s71, %s85
      %p87 = scmp.eq.s32.totalorder %s19, 0
      %p88 = por %p86, %p87
      %s90 = sadd.s32 %s89, 1
      %p93 = scmp.eq.s32.totalorder %s13, 3
      %p94 = scmp.ne.s32.totalorder %s89, %s91
      %p95 = scmp.eq.s32.totalorder %s13, 0
      %p96 = por %p94, %p95
      %p97 = scmp.ne.s32.totalorder %s89, %s91
      %p98 = scmp.eq.s32.totalorder %s18, 3
      %p99 = por %p97, %p98
      %p100 = scmp.ne.s32.totalorder %s91, %s92
      %p101 = scmp.eq.s32.totalorder %s18, 0
      %p102 = por %p100, %p101
      %p103 = scmp.ne.s32.totalorder %s91, %s92
      %p104 = scmp.eq.s32.totalorder %s19, 3
      %p105 = por %p103, %p104
      %p107 = scmp.ne.s32.totalorder %s92, %s106
      %p108 = scmp.eq.s32.totalorder %s19, 0
      %p109 = por %p107, %p108
      %s111 = sadd.s32 %s110, 1
      %p114 = scmp.eq.s32.totalorder %s13, 3
      %p115 = scmp.ne.s32.totalorder %s110, %s112
      %p116 = scmp.eq.s32.totalorder %s13, 0
      %p117 = por %p115, %p116
      %p118 = scmp.ne.s32.totalorder %s110, %s112
      %p119 = scmp.eq.s32.totalorder %s18, 3
      %p120 = por %p118, %p119
      %p121 = scmp.ne.s32.totalorder %s112, %s113
      %p122 = scmp.eq.s32.totalorder %s18, 0
      %p123 = por %p121, %p122
      %p124 = scmp.ne.s32.totalorder %s112, %s113
      %p125 = scmp.eq.s32.totalorder %s19, 3
      %p126 = por %p124, %p125
      %p128 = scmp.ne.s32.totalorder %s113, %s127
      %p129 = scmp.eq.s32.totalorder %s19, 0
      %p130 = por %p128, %p129
      %s132 = sadd.s32 %s131, 1
      %p135 = scmp.eq.s32.totalorder %s13, 3
      %p136 = scmp.ne.s32.totalorder %s131, %s133
      %p137 = scmp.eq.s32.totalorder %s13, 0
      %p138 = por %p136, %p137
      %p139 = scmp.ne.s32.totalorder %s131, %s133
      %p140 = scmp.eq.s32.totalorder %s18, 3
      %p141 = por %p139, %p140
      %p142 = scmp.ne.s32.totalorder %s133, %s134
      %p143 = scmp.eq.s32.totalorder %s18, 0
      %p144 = por %p142, %p143
      %p145 = scmp.ne.s32.totalorder %s133, %s134
      %p146 = scmp.eq.s32.totalorder %s19, 3
      %p147 = por %p145, %p146
      %p149 = scmp.ne.s32.totalorder %s134, %s148
      %p150 = scmp.eq.s32.totalorder %s19, 0
      %p151 = por %p149, %p150
      %s153 = sadd.s32 %s152, 1
      %p156 = scmp.eq.s32.totalorder %s13, 3
      %p157 = scmp.ne.s32.totalorder %s152, %s154
      %p158 = scmp.eq.s32.totalorder %s13, 0
      %p159 = por %p157, %p158
      %p160 = scmp.ne.s32.totalorder %s152, %s154
      %p161 = scmp.eq.s32.totalorder %s18, 3
      %p162 = por %p160, %p161
      %p163 = scmp.ne.s32.totalorder %s154, %s155
      %p164 = scmp.eq.s32.totalorder %s18, 0
      %p165 = por %p163, %p164
      %p166 = scmp.ne.s32.totalorder %s154, %s155
      %p167 = scmp.eq.s32.totalorder %s19, 3
      %p168 = por %p166, %p167
      %p170 = scmp.ne.s32.totalorder %s155, %s169
      %p171 = scmp.eq.s32.totalorder %s19, 0
      %p172 = por %p170, %p171
      %s173 = ssub.s32 %s13, %s20
      %p174 = scmp.eq.s32.totalorder %s173, 0
      %s176 = sadd.s32 %s175, 1
      %s177 = scalar_select %p174, %s175, %s176
      %p180 = pneg %p174
      %p181 = scmp.eq.s32.totalorder %s13, 3
      %p182 = por %p180, %p181
      %p183 = scmp.ne.s32.totalorder %s175, %s178
      %p184 = scmp.eq.s32.totalorder %s13, 0
      %p185 = por %p183, %p184
      %p186 = scmp.ne.s32.totalorder %s175, %s178
      %p187 = scmp.eq.s32.totalorder %s18, 3
      %p188 = por %p186, %p187
      %p189 = scmp.ne.s32.totalorder %s178, %s179
      %p190 = scmp.eq.s32.totalorder %s18, 0
      %p191 = por %p189, %p190
      %p192 = scmp.ne.s32.totalorder %s178, %s179
      %p193 = scmp.eq.s32.totalorder %s19, 3
      %p194 = por %p192, %p193
      %p196 = scmp.ne.s32.totalorder %s179, %s195
      %p197 = scmp.eq.s32.totalorder %s19, 0
      %p198 = por %p196, %p197
      %p199 = scmp.le.s32.totalorder 1, %s13
      %p200 = scmp.lt.s32.totalorder %s13, 5
      %p201 = pnand %p199, %p200
      %p202 = pneg %p201
      // Predicated region
      $region9: #{tpu_custom_call.1} parent=5 // pred_check
        _
      $region10: #{tpu_custom_call.1} parent=5 // pred_check_branch
        %204 = sbr.rel (%p201) target = $region12
      $region11: #{tpu_custom_call.1} parent=5 // pred_region
        %s205 = ssub.s32 %s13, 1
        // Predicated region
        $region13: #{tpu_custom_call.1} parent=11 // pred_check
          %p206 = pneg %p60
        $region14: #{tpu_custom_call.1} parent=11 // pred_check_branch
          %208 = sbr.rel (%p206) target = $region16
        $region15: #{tpu_custom_call.1} parent=11 // pred_region
          _
        $region16: #{tpu_custom_call.1} parent=11 // pred_fallthru
          _
        // Predicated region
        $region17: #{tpu_custom_call.1} parent=11 // pred_check
          %p209 = pneg %p81
        $region18: #{tpu_custom_call.1} parent=11 // pred_check_branch
          %211 = sbr.rel (%p209) target = $region20
        $region19: #{tpu_custom_call.1} parent=11 // pred_region
          _
        $region20: #{tpu_custom_call.1} parent=11 // pred_fallthru
          _
        // Predicated region
        $region21: #{tpu_custom_call.1} parent=11 // pred_check
          %p212 = pneg %p102
        $region22: #{tpu_custom_call.1} parent=11 // pred_check_branch
          %214 = sbr.rel (%p212) target = $region24
        $region23: #{tpu_custom_call.1} parent=11 // pred_region
          _
        $region24: #{tpu_custom_call.1} parent=11 // pred_fallthru
          _
        // Predicated region
        $region25: #{tpu_custom_call.1} parent=11 // pred_check
          %p215 = pneg %p123
        $region26: #{tpu_custom_call.1} parent=11 // pred_check_branch
          %217 = sbr.rel (%p215) target = $region28
        $region27: #{tpu_custom_call.1} parent=11 // pred_region
          _
        $region28: #{tpu_custom_call.1} parent=11 // pred_fallthru
          _
        // Predicated region
        $region29: #{tpu_custom_call.1} parent=11 // pred_check
          %p218 = pneg %p144
        $region30: #{tpu_custom_call.1} parent=11 // pred_check_branch
          %220 = sbr.rel (%p218) target = $region32
        $region31: #{tpu_custom_call.1} parent=11 // pred_region
          _
        $region32: #{tpu_custom_call.1} parent=11 // pred_fallthru
          _
        // Predicated region
        $region33: #{tpu_custom_call.1} parent=11 // pred_check
          %p221 = pneg %p165
        $region34: #{tpu_custom_call.1} parent=11 // pred_check_branch
          %223 = sbr.rel (%p221) target = $region36
        $region35: #{tpu_custom_call.1} parent=11 // pred_region
          _
        $region36: #{tpu_custom_call.1} parent=11 // pred_fallthru
          _
      $region12: #{tpu_custom_call.1} parent=5 // pred_fallthru
        _
      %p224 = scmp.lt.s32.totalorder %s13, 4
      // Predicated region
      $region37: #{tpu_custom_call.1} parent=5 // pred_check
        %p225 = pneg %p224
      $region38: #{tpu_custom_call.1} parent=5 // pred_check_branch
        %227 = sbr.rel (%p225) target = $region40
      $region39: #{tpu_custom_call.1} parent=5 // pred_region
        // Predicated region
        $region41: #{tpu_custom_call.1} parent=39 // pred_check
          %p228 = pneg %p33
        $region42: #{tpu_custom_call.1} parent=39 // pred_check_branch
          %230 = sbr.rel (%p228) target = $region44
        $region43: #{tpu_custom_call.1} parent=39 // pred_region
          %s231 = smul.u32 8, %s13
          %s232 = ssub.s32 25, %s231
          %p233 = scmp.lt.s32.totalorder %s232, 8
          %s234 = scalar_select %p233, %s232, 8
          %s235 = smul.u32 64, %s234
          %p236 = scmp.lt.s32.totalorder %s231, 24
          %s237 = scalar_select %p236, %s231, 24
          %s238 = smul.addr %s237, 4
          %s239 = scalar_lea.vmem %s0, %s238
          %s240 = smul.u32 8, %s13
          %s241 = ssub.s32 25, %s240
          %p242 = scmp.lt.s32.totalorder %s241, 8
          %s243 = scalar_select %p242, %s241, 8
          %s244 = smul.u32 64, %s243
        $region44: #{tpu_custom_call.1} parent=39 // pred_fallthru
          _
      $region40: #{tpu_custom_call.1} parent=5 // pred_fallthru
        _
      %p245 = scmp.le.s32.totalorder 1, %s13
      %p246 = scmp.lt.s32.totalorder %s13, 5
      %p247 = pnand %p245, %p246
      %p248 = pneg %p247
      // Predicated region
      $region45: #{tpu_custom_call.1} parent=5 // pred_check
        _
      $region46: #{tpu_custom_call.1} parent=5 // pred_check_branch
        %250 = sbr.rel (%p247) target = $region48
      $region47: #{tpu_custom_call.1} parent=5 // pred_region
        %s251 = ssub.s32 %s13, 1
        %s252 = smul.u32 8, %s18
        %s253 = ssub.s32 25, %s252
        %p254 = scmp.lt.s32.totalorder %s253, 8
        %s255 = scalar_select %p254, %s253, 8
        %s256 = smul.u32 64, %s255
        %p257 = scmp.lt.s32.totalorder %s252, 24
        %s258 = scalar_select %p257, %s252, 24
        %s259 = smul.addr %s258, 4
        %s260 = scalar_lea.vmem %s0, %s259
        %p261 = pneg %p39
        %p262 = pneg %p36
        %p263 = pneg %p60
        %p264 = pneg %p57
        %p265 = pneg %p81
        %p266 = pneg %p78
        %p267 = pneg %p102
        %p268 = pneg %p99
        %p269 = pneg %p123
        %p270 = pneg %p120
        %p271 = pneg %p144
        %p272 = pneg %p141
        %p273 = pneg %p165
        %p274 = pneg %p162
        %p275 = pneg %p191
        %p276 = pneg %p188
        %s277 = sand.u32 %s178, 1
        %s278 = sand.u32 %s178, 1
        %s279 = smul.addr %s278, 64
        %s280 = scalar_lea.vmem [#allocation2], %s279
        %s281 = smul.u32 8, %s18
        %s282 = ssub.s32 25, %s281
        %p283 = scmp.lt.s32.totalorder %s282, 8
        %s284 = scalar_select %p283, %s282, 8
        %s285 = smul.u32 64, %s284
        %p286 = scmp.lt.s32.totalorder %s281, 24
        %s287 = scalar_select %p286, %s281, 24
        %s288 = smul.addr %s287, 4
        %s289 = scalar_lea.vmem %s0, %s288
        %s290 = smul.u32 8, %s18
        %s291 = ssub.s32 25, %s290
        %p292 = scmp.lt.s32.totalorder %s291, 8
        %s293 = scalar_select %p292, %s291, 8
        %s294 = smul.u32 64, %s293
        %s295 = smul.u32 8, %s18
        %s296 = ssub.s32 25, %s295
        %p297 = scmp.lt.s32.totalorder %s296, 8
        %s298 = scalar_select %p297, %s296, 8
        %s299 = smul.u32 128, %s298
        %v301 = vld [vmem:[%s289] sm:$0xf]
        %v302 = vld [vmem:[%s289 + $0x4] sm:$0xf]
        %v303 = vld [vmem:[%s289 + $0x8] sm:$0xf]
        %v304 = vld [vmem:[%s289 + $0xc] sm:$0xf]
        %v305 = vld [vmem:[%s289 + $0x10] sm:$0xf]
        %v306 = vld [vmem:[%s289 + $0x14] sm:$0xf]
        %v307 = vld [vmem:[%s289 + $0x18] sm:$0xf]
        %v308 = vld [vmem:[%s289 + $0x1c] sm:$0xf]
        %v309 = vld [vmem:[%s1] sm:$0xf]
        %v310 = vld [vmem:[%s2] sm:$0x1]
        %v312 = vlaneseq
        %v313 = vshrl.u32 %v312, 7
        %v314 = vsub.s32 0, %v313
        %v315 = vrot.slane %v310, %v314
        %v325 = vunpack.c.l.b16 %v301
        %v326 = vunpack.c.l.b16 %v302
        %v327 = vunpack.c.l.b16 %v303
        %v328 = vunpack.c.l.b16 %v304
        %v329 = vunpack.c.l.b16 %v305
        %v330 = vunpack.c.l.b16 %v306
        %v331 = vunpack.c.l.b16 %v307
        %v332 = vunpack.c.l.b16 %v308
        %v333 = vpack.c.b16 %v326, %v325
        %v334 = vpack.c.b16 %v328, %v327
        %v335 = vpack.c.b16 %v330, %v329
        %v336 = vpack.c.b16 %v332, %v331
        %vm337 = vcmask 64512
        %v339 = vsel %vm337, %v333, 0
        %v342 = vsel %vm337, %v334, 0
        %v345 = vsel %vm337, %v335, 0
        %v348 = vsel %vm337, %v336, 0
        %vm350 = vcmask 1043456
        %v352 = vsel %vm350, %v309, 0
        %354 = vmatprep.subr.bf16.mxu0 0
        %355 = vmatpush1.bf16.msra.mxu0 %v352
        %356 = vmatprep.subr.bf16.mxu0 0
        %357 = vmatpush1.bf16.msra.mxu0 0
        %358 = vmatprep.subr.bf16.mxu0 0
        %359 = vmatpush1.bf16.msra.mxu0 0
        %360 = vmatprep.subr.bf16.mxu0 0
        %361 = vmatpush1.bf16.msra.mxu0 0
        %362 = vmatprep.subr.bf16.mxu0 0
        %363 = vmatpush1.bf16.msra.mxu0 0
        %364 = vmatprep.subr.bf16.mxu0 0
        %365 = vmatpush1.bf16.msra.mxu0 0
        %366 = vmatprep.subr.bf16.mxu0 0
        %367 = vmatpush1.bf16.msra.mxu0 0
        %368 = vmatprep.subr.bf16.mxu0 0
        %369 = vmatpush1.bf16.msra.mxu0 0
        %370 = vmatprep.subr.bf16.mxu0 0
        %371 = vmatpush1.bf16.msra.mxu0 0
        %372 = vmatprep.subr.bf16.mxu0 0
        %373 = vmatpush1.bf16.msra.mxu0 0
        %374 = vmatprep.subr.bf16.mxu0 0
        %375 = vmatpush1.bf16.msra.mxu0 0
        %376 = vmatprep.subr.bf16.mxu0 0
        %377 = vmatpush1.bf16.msra.mxu0 0
        %378 = vmatprep.subr.bf16.mxu0 0
        %379 = vmatpush1.bf16.msra.mxu0 0
        %380 = vmatprep.subr.bf16.mxu0 0
        %381 = vmatpush1.bf16.msra.mxu0 0
        %382 = vmatprep.subr.bf16.mxu0 0
        %383 = vmatpush1.bf16.msra.mxu0 0
        %384 = vmatprep.subr.bf16.mxu0 0
        %385 = vmatpush1.bf16.msra.mxu0 0
        %386 = vmatprep.mubr.bf16.mxu0 0
        %387 = vmatmul.mubr.bf16.gmra.mrb[0].mxu0 %v339
        %v388 = vpop.f32.mrb[0].mxu0
        %v389 = vadd.f32 %v315, %v388
        %v390 = vpop.f32.mrb[0].mxu0
        %v391 = vpop.f32.mrb[0].mxu0
        %v392 = vadd.f32 %v315, %v391
        %v393 = vpop.f32.mrb[0].mxu0
        %394 = vmatprep.mubr.bf16.mxu0 0
        %395 = vmatmul.mubr.bf16.gmra.mrb[0].mxu0 %v342
        %v396 = vpop.f32.mrb[0].mxu0
        %v397 = vadd.f32 %v315, %v396
        %v398 = vpop.f32.mrb[0].mxu0
        %v399 = vpop.f32.mrb[0].mxu0
        %v400 = vadd.f32 %v315, %v399
        %v401 = vpop.f32.mrb[0].mxu0
        %402 = vmatprep.mubr.bf16.mxu0 0
        %403 = vmatmul.mubr.bf16.gmra.mrb[0].mxu0 %v345
        %v404 = vpop.f32.mrb[0].mxu0
        %v405 = vadd.f32 %v315, %v404
        %v406 = vpop.f32.mrb[0].mxu0
        %v407 = vpop.f32.mrb[0].mxu0
        %v408 = vadd.f32 %v315, %v407
        %v409 = vpop.f32.mrb[0].mxu0
        %410 = vmatprep.mubr.bf16.mxu0 0
        %411 = vmatmul.mubr.bf16.gmra.mrb[0].mxu0 %v348
        %v412 = vpop.f32.mrb[0].mxu0
        %v413 = vadd.f32 %v315, %v412
        %v414 = vpop.f32.mrb[0].mxu0
        %v415 = vpop.f32.mrb[0].mxu0
        %v416 = vadd.f32 %v315, %v415
        %v417 = vpop.f32.mrb[0].mxu0
        %418 = vdwg.mxu0
        %v419 = vmax.f32 %v389, 0.0
        %v420 = vmax.f32 %v392, 0.0
        %v421 = vmax.f32 %v397, 0.0
        %v422 = vmax.f32 %v400, 0.0
        %v423 = vmax.f32 %v405, 0.0
        %v424 = vmax.f32 %v408, 0.0
        %v425 = vmax.f32 %v413, 0.0
        %v426 = vmax.f32 %v416, 0.0
        %v427 = vpack.c.bf16 %v420, %v419
        %v428 = vpack.c.bf16 %v422, %v421
        %v429 = vpack.c.bf16 %v424, %v423
        %v430 = vpack.c.bf16 %v426, %v425
        %v431 = vld [vmem:[%s3] sm:$0xf]
        %v432 = vld [vmem:[%s3 + $0x4] sm:$0xf]
        %v433 = vld [vmem:[%s3 + $0x8] sm:$0xf]
        %v434 = vld [vmem:[%s3 + $0xc] sm:$0xf]
        %v435 = vld [vmem:[%s3 + $0x10] sm:$0xf]
        %v436 = vld [vmem:[%s3 + $0x14] sm:$0xf]
        %v437 = vld [vmem:[%s3 + $0x18] sm:$0xf]
        %v438 = vld [vmem:[%s3 + $0x1c] sm:$0xf]
        %v439 = vld [vmem:[%s3 + $0x20] sm:$0xf]
        %v440 = vld [vmem:[%s3 + $0x24] sm:$0xf]
        %v441 = vld [vmem:[%s3 + $0x28] sm:$0xf]
        %v442 = vld [vmem:[%s3 + $0x2c] sm:$0xf]
        %v443 = vld [vmem:[%s3 + $0x30] sm:$0xf]
        %v444 = vld [vmem:[%s3 + $0x34] sm:$0xf]
        %v445 = vld [vmem:[%s3 + $0x38] sm:$0xf]
        %v446 = vld [vmem:[%s3 + $0x3c] sm:$0xf]
        %v447 = vld [vmem:[%s4] sm:$0x1]
        %v449 = vlaneseq
        %v450 = vshrl.u32 %v449, 7
        %v451 = vsub.s32 0, %v450
        %v452 = vrot.slane %v447, %v451
        %v470 = vunpack.c.l.b16 %v431
        %v471 = vunpack.c.l.b16 %v432
        %v472 = vunpack.c.l.b16 %v433
        %v473 = vunpack.c.l.b16 %v434
        %v474 = vunpack.c.l.b16 %v435
        %v475 = vunpack.c.l.b16 %v436
        %v476 = vunpack.c.l.b16 %v437
        %v477 = vunpack.c.l.b16 %v438
        %v478 = vunpack.c.l.b16 %v439
        %v479 = vunpack.c.l.b16 %v440
        %v480 = vunpack.c.l.b16 %v441
        %v481 = vunpack.c.l.b16 %v442
        %v482 = vunpack.c.l.b16 %v443
        %v483 = vunpack.c.l.b16 %v444
        %v484 = vunpack.c.l.b16 %v445
        %v485 = vunpack.c.l.b16 %v446
        %v486 = vpack.c.b16 %v471, %v470
        %v487 = vpack.c.b16 %v473, %v472
        %v488 = vpack.c.b16 %v475, %v474
        %v489 = vpack.c.b16 %v477, %v476
        %v490 = vpack.c.b16 %v479, %v478
        %v491 = vpack.c.b16 %v481, %v480
        %v492 = vpack.c.b16 %v483, %v482
        %v493 = vpack.c.b16 %v485, %v484
        %502 = vmatprep.subr.bf16.mxu0 0
        %503 = vmatpush1.bf16.msra.mxu0 %v486
        %504 = vmatprep.subr.bf16.mxu0 0
        %505 = vmatpush1.bf16.msra.mxu0 %v487
        %506 = vmatprep.subr.bf16.mxu0 0
        %507 = vmatpush1.bf16.msra.mxu0 %v488
        %508 = vmatprep.subr.bf16.mxu0 0
        %509 = vmatpush1.bf16.msra.mxu0 %v489
        %510 = vmatprep.subr.bf16.mxu0 0
        %511 = vmatpush1.bf16.msra.mxu0 %v490
        %512 = vmatprep.subr.bf16.mxu0 0
        %513 = vmatpush1.bf16.msra.mxu0 %v491
        %514 = vmatprep.subr.bf16.mxu0 0
        %515 = vmatpush1.bf16.msra.mxu0 %v492
        %516 = vmatprep.subr.bf16.mxu0 0
        %517 = vmatpush1.bf16.msra.mxu0 %v493
        %518 = vmatprep.subr.bf16.mxu0 0
        %519 = vmatpush1.bf16.msra.mxu0 0
        %520 = vmatprep.subr.bf16.mxu0 0
        %521 = vmatpush1.bf16.msra.mxu0 0
        %522 = vmatprep.subr.bf16.mxu0 0
        %523 = vmatpush1.bf16.msra.mxu0 0
        %524 = vmatprep.subr.bf16.mxu0 0
        %525 = vmatpush1.bf16.msra.mxu0 0
        %526 = vmatprep.subr.bf16.mxu0 0
        %527 = vmatpush1.bf16.msra.mxu0 0
        %528 = vmatprep.subr.bf16.mxu0 0
        %529 = vmatpush1.bf16.msra.mxu0 0
        %530 = vmatprep.subr.bf16.mxu0 0
        %531 = vmatpush1.bf16.msra.mxu0 0
        %532 = vmatprep.subr.bf16.mxu0 0
        %533 = vmatpush1.bf16.msra.mxu0 0
        %534 = vmatprep.mubr.bf16.mxu0 0
        %535 = vmatmul.mubr.bf16.gmra.mrb[0].mxu0 %v427
        %v536 = vpop.f32.mrb[0].mxu0
        %v537 = vadd.f32 %v452, %v536
        %v538 = vpop.f32.mrb[0].mxu0
        %v539 = vpop.f32.mrb[0].mxu0
        %v540 = vadd.f32 %v452, %v539
        %v541 = vpop.f32.mrb[0].mxu0
        %542 = vmatprep.mubr.bf16.mxu0 0
        %543 = vmatmul.mubr.bf16.gmra.mrb[0].mxu0 %v428
        %v544 = vpop.f32.mrb[0].mxu0
        %v545 = vadd.f32 %v452, %v544
        %v546 = vpop.f32.mrb[0].mxu0
        %v547 = vpop.f32.mrb[0].mxu0
        %v548 = vadd.f32 %v452, %v547
        %v549 = vpop.f32.mrb[0].mxu0
        %550 = vmatprep.mubr.bf16.mxu0 0
        %551 = vmatmul.mubr.bf16.gmra.mrb[0].mxu0 %v429
        %v552 = vpop.f32.mrb[0].mxu0
        %v553 = vadd.f32 %v452, %v552
        %v554 = vpop.f32.mrb[0].mxu0
        %v555 = vpop.f32.mrb[0].mxu0
        %v556 = vadd.f32 %v452, %v555
        %v557 = vpop.f32.mrb[0].mxu0
        %558 = vmatprep.mubr.bf16.mxu0 0
        %559 = vmatmul.mubr.bf16.gmra.mrb[0].mxu0 %v430
        %v560 = vpop.f32.mrb[0].mxu0
        %v561 = vadd.f32 %v452, %v560
        %v562 = vpop.f32.mrb[0].mxu0
        %v563 = vpop.f32.mrb[0].mxu0
        %v564 = vadd.f32 %v452, %v563
        %v565 = vpop.f32.mrb[0].mxu0
        %566 = vdwg.mxu0
        %v567 = vmax.f32 %v537, 0.0
        %v568 = vmax.f32 %v540, 0.0
        %v569 = vmax.f32 %v545, 0.0
        %v570 = vmax.f32 %v548, 0.0
        %v571 = vmax.f32 %v553, 0.0
        %v572 = vmax.f32 %v556, 0.0
        %v573 = vmax.f32 %v561, 0.0
        %v574 = vmax.f32 %v564, 0.0
        %v575 = vpack.c.bf16 %v568, %v567
        %v576 = vpack.c.bf16 %v570, %v569
        %v577 = vpack.c.bf16 %v572, %v571
        %v578 = vpack.c.bf16 %v574, %v573
        %v579 = vld [vmem:[%s5] sm:$0xf]
        %v580 = vld [vmem:[%s5 + $0x4] sm:$0xf]
        %v581 = vld [vmem:[%s5 + $0x8] sm:$0xf]
        %v582 = vld [vmem:[%s5 + $0xc] sm:$0xf]
        %v583 = vld [vmem:[%s5 + $0x10] sm:$0xf]
        %v584 = vld [vmem:[%s5 + $0x14] sm:$0xf]
        %v585 = vld [vmem:[%s5 + $0x18] sm:$0xf]
        %v586 = vld [vmem:[%s5 + $0x1c] sm:$0xf]
        %v587 = vld [vmem:[%s5 + $0x20] sm:$0xf]
        %v588 = vld [vmem:[%s5 + $0x24] sm:$0xf]
        %v589 = vld [vmem:[%s5 + $0x28] sm:$0xf]
        %v590 = vld [vmem:[%s5 + $0x2c] sm:$0xf]
        %v591 = vld [vmem:[%s5 + $0x30] sm:$0xf]
        %v592 = vld [vmem:[%s5 + $0x34] sm:$0xf]
        %v593 = vld [vmem:[%s5 + $0x38] sm:$0xf]
        %v594 = vld [vmem:[%s5 + $0x3c] sm:$0xf]
        %v595 = vld [vmem:[%s6] sm:$0x1]
        %v597 = vlaneseq
        %v598 = vshrl.u32 %v597, 7
        %v599 = vsub.s32 0, %v598
        %v600 = vrot.slane %v595, %v599
        %v618 = vunpack.c.l.b16 %v579
        %v619 = vunpack.c.l.b16 %v580
        %v620 = vunpack.c.l.b16 %v581
        %v621 = vunpack.c.l.b16 %v582
        %v622 = vunpack.c.l.b16 %v583
        %v623 = vunpack.c.l.b16 %v584
        %v624 = vunpack.c.l.b16 %v585
        %v625 = vunpack.c.l.b16 %v586
        %v626 = vunpack.c.l.b16 %v587
        %v627 = vunpack.c.l.b16 %v588
        %v628 = vunpack.c.l.b16 %v589
        %v629 = vunpack.c.l.b16 %v590
        %v630 = vunpack.c.l.b16 %v591
        %v631 = vunpack.c.l.b16 %v592
        %v632 = vunpack.c.l.b16 %v593
        %v633 = vunpack.c.l.b16 %v594
        %v634 = vpack.c.b16 %v619, %v618
        %v635 = vpack.c.b16 %v621, %v620
        %v636 = vpack.c.b16 %v623, %v622
        %v637 = vpack.c.b16 %v625, %v624
        %v638 = vpack.c.b16 %v627, %v626
        %v639 = vpack.c.b16 %v629, %v628
        %v640 = vpack.c.b16 %v631, %v630
        %v641 = vpack.c.b16 %v633, %v632
        %650 = vmatprep.subr.bf16.mxu0 0
        %651 = vmatpush1.bf16.msra.mxu0 %v634
        %652 = vmatprep.subr.bf16.mxu0 0
        %653 = vmatpush1.bf16.msra.mxu0 %v635
        %654 = vmatprep.subr.bf16.mxu0 0
        %655 = vmatpush1.bf16.msra.mxu0 %v636
        %656 = vmatprep.subr.bf16.mxu0 0
        %657 = vmatpush1.bf16.msra.mxu0 %v637
        %658 = vmatprep.subr.bf16.mxu0 0
        %659 = vmatpush1.bf16.msra.mxu0 %v638
        %660 = vmatprep.subr.bf16.mxu0 0
        %661 = vmatpush1.bf16.msra.mxu0 %v639
        %662 = vmatprep.subr.bf16.mxu0 0
        %663 = vmatpush1.bf16.msra.mxu0 %v640
        %664 = vmatprep.subr.bf16.mxu0 0
        %665 = vmatpush1.bf16.msra.mxu0 %v641
        %666 = vmatprep.subr.bf16.mxu0 0
        %667 = vmatpush1.bf16.msra.mxu0 0
        %668 = vmatprep.subr.bf16.mxu0 0
        %669 = vmatpush1.bf16.msra.mxu0 0
        %670 = vmatprep.subr.bf16.mxu0 0
        %671 = vmatpush1.bf16.msra.mxu0 0
        %672 = vmatprep.subr.bf16.mxu0 0
        %673 = vmatpush1.bf16.msra.mxu0 0
        %674 = vmatprep.subr.bf16.mxu0 0
        %675 = vmatpush1.bf16.msra.mxu0 0
        %676 = vmatprep.subr.bf16.mxu0 0
        %677 = vmatpush1.bf16.msra.mxu0 0
        %678 = vmatprep.subr.bf16.mxu0 0
        %679 = vmatpush1.bf16.msra.mxu0 0
        %680 = vmatprep.subr.bf16.mxu0 0
        %681 = vmatpush1.bf16.msra.mxu0 0
        %682 = vmatprep.mubr.bf16.mxu0 0
        %683 = vmatmul.mubr.bf16.gmra.mrb[0].mxu0 %v575
        %v684 = vpop.f32.mrb[0].mxu0
        %v685 = vadd.f32 %v600, %v684
        %v686 = vpop.f32.mrb[0].mxu0
        %v687 = vpop.f32.mrb[0].mxu0
        %v688 = vadd.f32 %v600, %v687
        %v689 = vpop.f32.mrb[0].mxu0
        %690 = vmatprep.mubr.bf16.mxu0 0
        %691 = vmatmul.mubr.bf16.gmra.mrb[0].mxu0 %v576
        %v692 = vpop.f32.mrb[0].mxu0
        %v693 = vadd.f32 %v600, %v692
        %v694 = vpop.f32.mrb[0].mxu0
        %v695 = vpop.f32.mrb[0].mxu0
        %v696 = vadd.f32 %v600, %v695
        %v697 = vpop.f32.mrb[0].mxu0
        %698 = vmatprep.mubr.bf16.mxu0 0
        %699 = vmatmul.mubr.bf16.gmra.mrb[0].mxu0 %v577
        %v700 = vpop.f32.mrb[0].mxu0
        %v701 = vadd.f32 %v600, %v700
        %v702 = vpop.f32.mrb[0].mxu0
        %v703 = vpop.f32.mrb[0].mxu0
        %v704 = vadd.f32 %v600, %v703
        %v705 = vpop.f32.mrb[0].mxu0
        %706 = vmatprep.mubr.bf16.mxu0 0
        %707 = vmatmul.mubr.bf16.gmra.mrb[0].mxu0 %v578
        %v708 = vpop.f32.mrb[0].mxu0
        %v709 = vadd.f32 %v600, %v708
        %v710 = vpop.f32.mrb[0].mxu0
        %v711 = vpop.f32.mrb[0].mxu0
        %v712 = vadd.f32 %v600, %v711
        %v713 = vpop.f32.mrb[0].mxu0
        %714 = vdwg.mxu0
        %vm715 = vcmask 31744
        %716 = vst.msk [vmem:[%s280] sm:$0xff] %vm715, %v685
        %717 = vst.msk [vmem:[%s280 + $0x8] sm:$0xff] %vm715, %v688
        %718 = vst.msk [vmem:[%s280 + $0x10] sm:$0xff] %vm715, %v693
        %719 = vst.msk [vmem:[%s280 + $0x18] sm:$0xff] %vm715, %v696
        %720 = vst.msk [vmem:[%s280 + $0x20] sm:$0xff] %vm715, %v701
        %721 = vst.msk [vmem:[%s280 + $0x28] sm:$0xff] %vm715, %v704
        %722 = vst.msk [vmem:[%s280 + $0x30] sm:$0xff] %vm715, %v709
        %723 = vst.msk [vmem:[%s280 + $0x38] sm:$0xff] %vm715, %v712
        %s724 = sand.u32 %s178, 1
        %s725 = sand.u32 %s178, 1
        %s726 = smul.addr %s725, 64
        %s727 = scalar_lea.vmem [#allocation2], %s726
        // Predicated region
        $region49: #{tpu_custom_call.1} parent=47 // pred_check
          %p728 = pneg %p188
        $region50: #{tpu_custom_call.1} parent=47 // pred_check_branch
          %730 = sbr.rel (%p728) target = $region52
        $region51: #{tpu_custom_call.1} parent=47 // pred_region
          %s731 = smul.u32 8, %s18
          %s732 = ssub.s32 25, %s731
          %p733 = scmp.lt.s32.totalorder %s732, 8
          %s734 = scalar_select %p733, %s732, 8
          %s735 = smul.u32 128, %s734
          %p736 = scmp.ne.s32.totalorder 0, %s735
          %s737 = smul.addr %s731, 8
          %s738 = scalar_lea.vmem %s7, %s737
          // Predicated region
          $region53: #{tpu_custom_call.1} parent=51 // pred_check
            %p739 = pneg %p736
          $region54: #{tpu_custom_call.1} parent=51 // pred_check_branch
            %741 = sbr.rel (%p739) target = $region56
          $region55: #{tpu_custom_call.1} parent=51 // pred_region
            // Predicated region
            $region57: #{tpu_custom_call.1} parent=55 // pred_check
              _
            $region58: #{tpu_custom_call.1} parent=55 // pred_check_branch
              %743 = sbr.rel (0) target = $region60
            $region59: #{tpu_custom_call.1} parent=55 // pred_region
              // Predicated region
              $region79: #{tpu_custom_call.1} parent=59 // pred_check
                _
              $region80: #{tpu_custom_call.1} parent=59 // pred_check_branch
                %806 = sbr.rel (0) target = $region82
              $region81: #{tpu_custom_call.1} parent=59 // pred_region
                %s807 = sshrl.u32 %s734, 3
                // While loop
                $region83: #{tpu_custom_call.1} parent=81 // loop_pre_header
                  _
                $region84: #{tpu_custom_call.1} parent=81 // loop_header
                  %s809 = sphi 0, %s811
                  %p810 = scmp.ge.s32.totalorder %s809, %s807
                  %s814 = sphi 0, %s835
                  %s815 = sphi %s727, %s838
                  %s816 = sphi %s738, %s839
                $region85: #{tpu_custom_call.1} parent=81 // loop_header_branch
                  %813 = sbr.rel (%p810) target = $region89
                $region86: #{tpu_custom_call.1} parent=81 // loop_body
                  %v817 = vld [vmem:[%s815] sm:$0xff]
                  %818 = vst [vmem:[%s816] sm:$0xff] %v817
                  %v819 = vld [vmem:[%s815 + $0x8] sm:$0xff]
                  %820 = vst [vmem:[%s816 + $0x8] sm:$0xff] %v819
                  %v821 = vld [vmem:[%s815 + $0x10] sm:$0xff]
                  %822 = vst [vmem:[%s816 + $0x10] sm:$0xff] %v821
                  %v823 = vld [vmem:[%s815 + $0x18] sm:$0xff]
                  %824 = vst [vmem:[%s816 + $0x18] sm:$0xff] %v823
                  %v825 = vld [vmem:[%s815 + $0x20] sm:$0xff]
                  %826 = vst [vmem:[%s816 + $0x20] sm:$0xff] %v825
                  %v827 = vld [vmem:[%s815 + $0x28] sm:$0xff]
                  %828 = vst [vmem:[%s816 + $0x28] sm:$0xff] %v827
                  %v829 = vld [vmem:[%s815 + $0x30] sm:$0xff]
                  %830 = vst [vmem:[%s816 + $0x30] sm:$0xff] %v829
                  %v831 = vld [vmem:[%s815 + $0x38] sm:$0xff]
                  %832 = vst [vmem:[%s816 + $0x38] sm:$0xff] %v831
                  %s833 = sadd.s32 1, %s814
                  %p834 = scmp.ge.s32.totalorder %s833, %s807
                  %s835 = scalar_select %p834, 0, %s833
                  %s836 = smul.u32 %s835, 64
                  %s837 = smul.u32 %s835, 64
                  %s838 = scalar_lea.vmem %s727, %s836 [#allocation2]
                  %s839 = scalar_lea.vmem %s738, %s837
                $region87: #{tpu_custom_call.1} parent=81 // loop_footer
                  %s811 = sadd.s32 %s809, 1
                $region88: #{tpu_custom_call.1} parent=81 // loop_footer_branch
                  %808 = sbr.rel target = $region84
                $region89: #{tpu_custom_call.1} parent=81 // loop_exit
                  _
                %s840 = sshrl.u32 %s734, 3
                %s841 = sand.u32 %s734, 7
                %s842 = smul.u32 %s840, 8
                %s843 = smul.u32 8, %s842
                %s844 = scalar_lea.vmem %s727, %s843 [#allocation2]
                %s845 = smul.u32 8, %s842
                %s846 = scalar_lea.vmem %s738, %s845
                // While loop
                $region90: #{tpu_custom_call.1} parent=81 // loop_pre_header
                  _
                $region91: #{tpu_custom_call.1} parent=81 // loop_header
                  %s848 = sphi 0, %s850
                  %p849 = scmp.ge.s32.totalorder %s848, %s841
                  %s853 = sphi 0, %s860
                  %s854 = sphi %s844, %s863
                  %s855 = sphi %s846, %s864
                $region92: #{tpu_custom_call.1} parent=81 // loop_header_branch
                  %852 = sbr.rel (%p849) target = $region96
                $region93: #{tpu_custom_call.1} parent=81 // loop_body
                  %v856 = vld [vmem:[%s854] sm:$0xff]
                  %857 = vst [vmem:[%s855] sm:$0xff] %v856
                  %s858 = sadd.s32 1, %s853
                  %p859 = scmp.ge.s32.totalorder %s858, %s841
                  %s860 = scalar_select %p859, 0, %s858
                  %s861 = smul.u32 %s860, 8
                  %s862 = smul.u32 %s860, 8
                  %s863 = scalar_lea.vmem %s844, %s861 [#allocation2]
                  %s864 = scalar_lea.vmem %s846, %s862
                $region94: #{tpu_custom_call.1} parent=81 // loop_footer
                  %s850 = sadd.s32 %s848, 1
                $region95: #{tpu_custom_call.1} parent=81 // loop_footer_branch
                  %847 = sbr.rel target = $region91
                $region96: #{tpu_custom_call.1} parent=81 // loop_exit
                  _
              $region82: #{tpu_custom_call.1} parent=59 // pred_fallthru
                _
              // Predicated region
              $region97: #{tpu_custom_call.1} parent=59 // pred_check
                _
              $region98: #{tpu_custom_call.1} parent=59 // pred_check_branch
                %866 = sbr.rel target = $region100
              $region99: #{tpu_custom_call.1} parent=59 // pred_region
                _
              $region100: #{tpu_custom_call.1} parent=59 // pred_fallthru
                _
            $region60: #{tpu_custom_call.1} parent=55 // pred_fallthru
              _
            // Predicated region
            $region61: #{tpu_custom_call.1} parent=55 // pred_check
              _
            $region62: #{tpu_custom_call.1} parent=55 // pred_check_branch
              %745 = sbr.rel target = $region64
            $region63: #{tpu_custom_call.1} parent=55 // pred_region
              %s747 = sshrl.u32 %s734, 3
              // While loop
              $region65: #{tpu_custom_call.1} parent=63 // loop_pre_header
                _
              $region66: #{tpu_custom_call.1} parent=63 // loop_header
                %s749 = sphi 0, %s751
                %p750 = scmp.ge.s32.totalorder %s749, %s747
                %s754 = sphi 0, %s775
                %s755 = sphi %s727, %s778
                %s756 = sphi %s738, %s779
              $region67: #{tpu_custom_call.1} parent=63 // loop_header_branch
                %753 = sbr.rel (%p750) target = $region71
              $region68: #{tpu_custom_call.1} parent=63 // loop_body
                %v757 = vld [vmem:[%s755] sm:$0xff]
                %758 = vst [vmem:[%s756] sm:$0xff] %v757
                %v759 = vld [vmem:[%s755 + $0x8] sm:$0xff]
                %760 = vst [vmem:[%s756 + $0x8] sm:$0xff] %v759
                %v761 = vld [vmem:[%s755 + $0x10] sm:$0xff]
                %762 = vst [vmem:[%s756 + $0x10] sm:$0xff] %v761
                %v763 = vld [vmem:[%s755 + $0x18] sm:$0xff]
                %764 = vst [vmem:[%s756 + $0x18] sm:$0xff] %v763
                %v765 = vld [vmem:[%s755 + $0x20] sm:$0xff]
                %766 = vst [vmem:[%s756 + $0x20] sm:$0xff] %v765
                %v767 = vld [vmem:[%s755 + $0x28] sm:$0xff]
                %768 = vst [vmem:[%s756 + $0x28] sm:$0xff] %v767
                %v769 = vld [vmem:[%s755 + $0x30] sm:$0xff]
                %770 = vst [vmem:[%s756 + $0x30] sm:$0xff] %v769
                %v771 = vld [vmem:[%s755 + $0x38] sm:$0xff]
                %772 = vst [vmem:[%s756 + $0x38] sm:$0xff] %v771
                %s773 = sadd.s32 1, %s754
                %p774 = scmp.ge.s32.totalorder %s773, %s747
                %s775 = scalar_select %p774, 0, %s773
                %s776 = smul.u32 %s775, 64
                %s777 = smul.u32 %s775, 64
                %s778 = scalar_lea.vmem %s727, %s776 [#allocation2]
                %s779 = scalar_lea.vmem %s738, %s777
              $region69: #{tpu_custom_call.1} parent=63 // loop_footer
                %s751 = sadd.s32 %s749, 1
              $region70: #{tpu_custom_call.1} parent=63 // loop_footer_branch
                %748 = sbr.rel target = $region66
              $region71: #{tpu_custom_call.1} parent=63 // loop_exit
                _
              %s780 = sshrl.u32 %s734, 3
              %s781 = sand.u32 %s734, 7
              %s782 = smul.u32 %s780, 8
              %s783 = smul.u32 8, %s782
              %s784 = scalar_lea.vmem %s727, %s783 [#allocation2]
              %s785 = smul.u32 8, %s782
              %s786 = scalar_lea.vmem %s738, %s785
              // While loop
              $region72: #{tpu_custom_call.1} parent=63 // loop_pre_header
                _
              $region73: #{tpu_custom_call.1} parent=63 // loop_header
                %s788 = sphi 0, %s790
                %p789 = scmp.ge.s32.totalorder %s788, %s781
                %s793 = sphi 0, %s800
                %s794 = sphi %s784, %s803
                %s795 = sphi %s786, %s804
              $region74: #{tpu_custom_call.1} parent=63 // loop_header_branch
                %792 = sbr.rel (%p789) target = $region78
              $region75: #{tpu_custom_call.1} parent=63 // loop_body
                %v796 = vld [vmem:[%s794] sm:$0xff]
                %797 = vst [vmem:[%s795] sm:$0xff] %v796
                %s798 = sadd.s32 1, %s793
                %p799 = scmp.ge.s32.totalorder %s798, %s781
                %s800 = scalar_select %p799, 0, %s798
                %s801 = smul.u32 %s800, 8
                %s802 = smul.u32 %s800, 8
                %s803 = scalar_lea.vmem %s784, %s801 [#allocation2]
                %s804 = scalar_lea.vmem %s786, %s802
              $region76: #{tpu_custom_call.1} parent=63 // loop_footer
                %s790 = sadd.s32 %s788, 1
              $region77: #{tpu_custom_call.1} parent=63 // loop_footer_branch
                %787 = sbr.rel target = $region73
              $region78: #{tpu_custom_call.1} parent=63 // loop_exit
                _
            $region64: #{tpu_custom_call.1} parent=55 // pred_fallthru
              _
          $region56: #{tpu_custom_call.1} parent=51 // pred_fallthru
            _
          %867 = vnop
        $region52: #{tpu_custom_call.1} parent=47 // pred_fallthru
          _
      $region48: #{tpu_custom_call.1} parent=5 // pred_fallthru
        _
      %p868 = scmp.le.s32.totalorder 2, %s13
      // Predicated region
      $region101: #{tpu_custom_call.1} parent=5 // pred_check
        %p869 = pneg %p868
      $region102: #{tpu_custom_call.1} parent=5 // pred_check_branch
        %871 = sbr.rel (%p869) target = $region104
      $region103: #{tpu_custom_call.1} parent=5 // pred_region
        %s872 = ssub.s32 %s13, 2
        // Predicated region
        $region105: #{tpu_custom_call.1} parent=103 // pred_check
          %p873 = pneg %p194
        $region106: #{tpu_custom_call.1} parent=103 // pred_check_branch
          %875 = sbr.rel (%p873) target = $region108
        $region107: #{tpu_custom_call.1} parent=103 // pred_region
          %s876 = sand.u32 %s179, 1
          %s877 = sand.u32 %s179, 1
          %s878 = smul.addr %s877, 64
          %s879 = scalar_lea.vmem [#allocation2], %s878
        $region108: #{tpu_custom_call.1} parent=103 // pred_fallthru
          _
      $region104: #{tpu_custom_call.1} parent=5 // pred_fallthru
        _
    $region6: #{tpu_custom_call.1} parent=1 // loop_footer
      %s17 = sadd.s32 1, %s13
    $region7: #{tpu_custom_call.1} parent=1 // loop_footer_branch
      %12 = sbr.rel target = $region3
    $region8: #{tpu_custom_call.1} parent=1 // loop_exit
      _

</llo_original>
